<compile_context>
chip_gen: v7x
topology: tpu7x:2x2x1
jax: 0.10.0
libtpu: 0.0.40
codegen_flags: <defaults>
</compile_context>

<pallas_src>
import jax
import jax.numpy as jnp
from jax.experimental import pallas as pl
from jax.experimental.pallas import tpu as pltpu


def _attention_kernel(q_ref, c_ref, out_ref, scores_ref):
    # q_ref: (Bt, tq, D), c_ref: (Bt, Lc, D)
    q = q_ref[...]
    c = c_ref[...]

    # attn = query @ context^T, batched, contraction on the last dim of both
    # operands (no materialized transpose), f32 accumulation on the MXU.
    s = jnp.einsum("bqd,bkd->bqk", q, c, preferred_element_type=jnp.float32)

    # Numerically stable softmax over the context (input_len) axis.
    m = jnp.max(s, axis=-1, keepdims=True)
    p = jnp.exp(s - m)
    l = jnp.sum(p, axis=-1, keepdims=True)
    # Exact reciprocal: scores are returned by the module. Use approx=True if
    # approximate attention weights are acceptable (moves the divide to the EUP).
    scores = p * pl.reciprocal(l, approx=False)

    # attn_out = scores @ context, batched, f32 accumulation.
    out = jnp.einsum(
        "bqk,bkd->bqd", scores.astype(c.dtype), c,
        preferred_element_type=jnp.float32,
    )

    out_ref[...] = out.astype(out_ref.dtype)
    scores_ref[...] = scores.astype(scores_ref.dtype)


def _largest_divisor_at_most(n, target):
    t = max(1, min(n, target))
    while n % t:
        t -= 1
    return t


def _pick_batch_tile(B, Lq, Lc, D, itemsize, vmem_budget_bytes=8 << 20):
    """Largest divisor of B whose per-step VMEM footprint fits the budget."""
    # Double-buffered inputs/outputs + f32 intermediates (s, p, scores, out).
    io_bytes = (Lq * D + Lc * D + Lq * D + Lq * Lc) * itemsize * 2
    tmp_bytes = (3 * Lq * Lc + Lq * D) * 4
    per_b = max(1, io_bytes + tmp_bytes)
    max_bt = max(1, vmem_budget_bytes // per_b)
    # Enough query rows per step to amortize grid overhead / fill MXU passes,
    # but no need to go far beyond ~1024 rows per step.
    row_cap = max(1, 1024 // max(Lq, 1))
    return _largest_divisor_at_most(B, min(B, max_bt, row_cap))


def attention(query, context):
    """query: (B, Lq, D), context: (B, Lc, D) -> (attn_out (B,Lq,D), scores (B,Lq,Lc))."""
    B, Lq, D = query.shape
    Bc, Lc, Dc = context.shape
    assert B == Bc and D == Dc

    itemsize = jnp.dtype(query.dtype).itemsize
    Bt = _pick_batch_tile(B, Lq, Lc, D, itemsize)
    # Tile Lq only when it splits cleanly into 256-row tiles (keeps the (8,128)
    # block constraint satisfied); otherwise keep the full Lq per step.
    tq = 256 if (Lq > 256 and Lq % 256 == 0) else Lq

    out_shapes = (
        jax.ShapeDtypeStruct((B, Lq, D), query.dtype),
        jax.ShapeDtypeStruct((B, Lq, Lc), query.dtype),
    )

    grid_spec = pltpu.PrefetchScalarGridSpec(
        num_scalar_prefetch=0,
        grid=(B // Bt, Lq // tq),
        in_specs=[
            pl.BlockSpec((Bt, tq, D), lambda b, q: (b, q, 0)),
            pl.BlockSpec((Bt, Lc, D), lambda b, q: (b, 0, 0)),
        ],
        out_specs=[
            pl.BlockSpec((Bt, tq, D), lambda b, q: (b, q, 0)),
            pl.BlockSpec((Bt, tq, Lc), lambda b, q: (b, q, 0)),
        ],
    )

    return pl.pallas_call(
        _attention_kernel,
        out_shape=out_shapes,
        grid_spec=grid_spec,
        compiler_params=pltpu.CompilerParams(
            dimension_semantics=("parallel", "parallel"),
        ),
    )(query, context)


def _reference(query, context):
    # Pure-JAX reference mirroring the PyTorch forward.
    attn = jnp.einsum("bqd,bkd->bqk", query, context)
    scores = jax.nn.softmax(attn, axis=-1)
    out = jnp.einsum("bqk,bkd->bqd", scores, context)
    return out, scores


if __name__ == "__main__":
    key = jax.random.PRNGKey(0)
    kq, kc = jax.random.split(key)

    B, Lq, Lc, D = 2, 8, 16, 32
    query = jax.random.normal(kq, (B, Lq, D), dtype=jnp.float32)
    context = jax.random.normal(kc, (B, Lc, D), dtype=jnp.float32)

    out, scores = attention(query, context)
    out = jax.block_until_ready(out)
    scores = jax.block_until_ready(scores)

    ref_out, ref_scores = _reference(query, context)
    assert jnp.allclose(out, ref_out, atol=1e-5, rtol=1e-5), "attn_out mismatch"
    assert jnp.allclose(scores, ref_scores, atol=1e-5, rtol=1e-5), "scores mismatch"

    print("KERNEL_OK")
</pallas_src>

<mosaic_0001>
module attributes {stable_mosaic.version = 11 : i64} {
  func.func @_attention_kernel(%arg0: i32, %arg1: i32, %arg2: memref<2x8x32xf32, #tpu.memory_space<vmem>>, %arg3: memref<2x16x32xf32, #tpu.memory_space<vmem>>, %arg4: memref<2x8x32xf32, #tpu.memory_space<vmem>>, %arg5: memref<2x8x16xf32, #tpu.memory_space<vmem>>) attributes {dimension_semantics = [#tpu.dimension_semantics<parallel>, #tpu.dimension_semantics<parallel>], iteration_bounds = array<i64: 1, 1>, scalar_prefetch = 0 : i64, scratch_operands = 0 : i64, tpu.core_type = #tpu.core_type<tc>, window_params = [{transform_indices = @transform_0, window_bounds = array<i64: 2, 8, 32>}, {transform_indices = @transform_1, window_bounds = array<i64: 2, 16, 32>}, {transform_indices = @transform_2, window_bounds = array<i64: 2, 8, 32>}, {transform_indices = @transform_3, window_bounds = array<i64: 2, 8, 16>}]} {
    %c0 = arith.constant 0 : index
    %c0_0 = arith.constant 0 : index
    %c0_1 = arith.constant 0 : index
    %0 = vector.load %arg2[%c0, %c0_0, %c0_1] : memref<2x8x32xf32, #tpu.memory_space<vmem>>, vector<2x8x32xf32>
    %c0_2 = arith.constant 0 : index
    %c0_3 = arith.constant 0 : index
    %c0_4 = arith.constant 0 : index
    %1 = vector.load %arg3[%c0_2, %c0_3, %c0_4] : memref<2x16x32xf32, #tpu.memory_space<vmem>>, vector<2x16x32xf32>
    "tpu.trace_start"() <{level = 10 : i32, message = "bqd,bkd->bqk"}> : () -> ()
    %cst = arith.constant dense<0.000000e+00> : vector<2x8x16xf32>
    %2 = tpu.matmul %0, %1, %cst {dimension_numbers = #tpu.dot_dimension_numbers<[2], [2], [1], [1], [0, 0, 0, 1, 1, 1], [0], [0]>} : vector<2x8x32xf32>, vector<2x16x32xf32>, vector<2x8x16xf32> -> vector<2x8x16xf32>
    "tpu.trace_stop"() : () -> ()
    %cst_5 = arith.constant dense<0xFF800000> : vector<2x8xf32>
    %3 = vector.multi_reduction <maximumf>, %2, %cst_5 [2] : vector<2x8x16xf32> to vector<2x8xf32>
    %4 = vector.shape_cast %3 : vector<2x8xf32> to vector<2x8x1xf32>
    %5 = vector.broadcast %4 : vector<2x8x1xf32> to vector<2x8x16xf32>
    %6 = arith.subf %2, %5 : vector<2x8x16xf32>
    %7 = math.exp %6 : vector<2x8x16xf32>
    %cst_6 = arith.constant dense<0.000000e+00> : vector<2x8xf32>
    %8 = vector.multi_reduction <add>, %7, %cst_6 [2] : vector<2x8x16xf32> to vector<2x8xf32>
    %9 = vector.shape_cast %8 : vector<2x8xf32> to vector<2x8x1xf32>
    %10 = tpu.reciprocal %9 : vector<2x8x1xf32> -> vector<2x8x1xf32>
    %11 = vector.broadcast %10 : vector<2x8x1xf32> to vector<2x8x16xf32>
    %12 = arith.mulf %7, %11 : vector<2x8x16xf32>
    "tpu.trace_start"() <{level = 10 : i32, message = "bqk,bkd->bqd"}> : () -> ()
    %cst_7 = arith.constant dense<0.000000e+00> : vector<2x8x32xf32>
    %13 = tpu.matmul %12, %1, %cst_7 {dimension_numbers = #tpu.dot_dimension_numbers<[2], [1], [1], [2], [0, 0, 0, 1, 1, 2], [0], [0]>} : vector<2x8x16xf32>, vector<2x16x32xf32>, vector<2x8x32xf32> -> vector<2x8x32xf32>
    "tpu.trace_stop"() : () -> ()
    %c0_8 = arith.constant 0 : index
    %c0_9 = arith.constant 0 : index
    %c0_10 = arith.constant 0 : index
    %14 = vector.load %arg4[%c0_8, %c0_9, %c0_10] : memref<2x8x32xf32, #tpu.memory_space<vmem>>, vector<2x8x32xf32>
    tpu.vector_store %arg4[%c0_8, %c0_9, %c0_10], %13 {strides = array<i32>} : memref<2x8x32xf32, #tpu.memory_space<vmem>>, vector<2x8x32xf32>,
    %c0_11 = arith.constant 0 : index
    %c0_12 = arith.constant 0 : index
    %c0_13 = arith.constant 0 : index
    %15 = vector.load %arg5[%c0_11, %c0_12, %c0_13] : memref<2x8x16xf32, #tpu.memory_space<vmem>>, vector<2x8x16xf32>
    tpu.vector_store %arg5[%c0_11, %c0_12, %c0_13], %12 {strides = array<i32>} : memref<2x8x16xf32, #tpu.memory_space<vmem>>, vector<2x8x16xf32>,
    return
  }
  func.func @transform_0(%arg0: i32, %arg1: i32) -> (i32, i32, i32) {
    %c0_i32 = arith.constant 0 : i32
    %c0_i32_0 = arith.constant 0 : i32
    return %arg0, %arg1, %c0_i32 : i32, i32, i32
  }
  func.func @transform_1(%arg0: i32, %arg1: i32) -> (i32, i32, i32) {
    %c0_i32 = arith.constant 0 : i32
    %c0_i32_0 = arith.constant 0 : i32
    %c0_i32_1 = arith.constant 0 : i32
    return %arg0, %c0_i32, %c0_i32_0 : i32, i32, i32
  }
  func.func @transform_2(%arg0: i32, %arg1: i32) -> (i32, i32, i32) {
    %c0_i32 = arith.constant 0 : i32
    %c0_i32_0 = arith.constant 0 : i32
    return %arg0, %arg1, %c0_i32 : i32, i32, i32
  }
  func.func @transform_3(%arg0: i32, %arg1: i32) -> (i32, i32, i32) {
    %c0_i32 = arith.constant 0 : i32
    %c0_i32_0 = arith.constant 0 : i32
    return %arg0, %arg1, %c0_i32 : i32, i32, i32
  }
}

</mosaic_0001>

<llo_original>
// kernel: tpu_custom_call.1
$region0: #{tpu_custom_call.1}
  #allocation0 [shape = 'u32[]', space=smem, size = 0x4, offset = 0x4, fixed_abs, tag = 'smem constant byte address 0x4 - core index']
  #allocation1 [shape = 'u32[144,128]{1,0:T(1,128)}', space=vmem, size = 0x12000, scoped, tag = 'internal scratch']
  %s0 = inlined_call_operand.hbm [shape: f32[2,8,32], index: 0, kind: input, shape index: {}]
  %s1 = inlined_call_operand.hbm [shape: f32[2,16,32], index: 1, kind: input, shape index: {}]
  %s2 = inlined_call_operand.hbm [shape: f32[2,8,32], index: 2, kind: output, shape index: {0}]
  %s3 = inlined_call_operand.hbm [shape: f32[2,8,16], index: 3, kind: output, shape index: {1}]
  %4 = xla_tuple %s2, %s3
  %s5 = sld [smem:[#allocation0]]
  $region34: #{tpu_custom_call.1} parent=0
    _
  %s7 = ssub.s32 1, %s5
  %s8 = scalar_select 0, %s7, %s5
  $region1: #{tpu_custom_call.1} parent=0
    #allocation2 [shape = 'u8[8192]{0}', space=vmem, size = 0x2000, scoped, tag = 'input window, operand 0, single buffered']
    #allocation3 [shape = 's32[1]{0}', space=sflag, size = 0x4, scoped, tag = 'scoped memory for tpu_custom_call.1']
    #allocation4 [shape = 's32[1]{0}', space=sflag, size = 0x4, scoped, tag = 'scoped memory for tpu_custom_call.1']
    #allocation5 [shape = 'u8[16384]{0}', space=vmem, size = 0x4000, scoped, tag = 'input window, operand 1, single buffered']
    #allocation6 [shape = 's32[1]{0}', space=sflag, size = 0x4, scoped, tag = 'scoped memory for tpu_custom_call.1']
    #allocation7 [shape = 'u8[8192]{0}', space=vmem, size = 0x2000, scoped, tag = 'output window, operand 0, single buffered']
    #allocation8 [shape = 'u8[8192]{0}', space=vmem, size = 0x2000, scoped, tag = 'output window, operand 1, single buffered']
    #allocation9 [shape = 's32[1]{0}', space=sflag, size = 0x4, scoped, tag = 'scoped memory for tpu_custom_call.1']
    %9 = vsyncpa [#allocation3], 0
    %10 = vsyncpa [#allocation6], 0
    %11 = vsyncpa [#allocation4], 0
    %12 = vsyncpa [#allocation9], 0
    // Predicated region
    $region2: #{tpu_custom_call.1} parent=1 // pred_check
      _
    $region3: #{tpu_custom_call.1} parent=1 // pred_check_branch
      %14 = sbr.rel (0) target = $region5
    $region4: #{tpu_custom_call.1} parent=1 // pred_region
      %s16 = ssub.s32 256, 256
      %17 = vsyncadd [#allocation3], %s16
      %s18 = sshll.u32 [#allocation2], 4
      %s19 = int_to_ptr.vmem [resolvable:$true] %s18
      %24 = dma.hbm_to_vmem [thread:$0]  %s0, 256, %s19, [#allocation3], 128, 128, 8
    $region5: #{tpu_custom_call.1} parent=1 // pred_fallthru
      _
    // Predicated region
    $region6: #{tpu_custom_call.1} parent=1 // pred_check
      _
    $region7: #{tpu_custom_call.1} parent=1 // pred_check_branch
      %26 = sbr.rel (0) target = $region9
    $region8: #{tpu_custom_call.1} parent=1 // pred_region
      %s28 = ssub.s32 512, 512
      %29 = vsyncadd [#allocation6], %s28
      %s30 = sshll.u32 [#allocation5], 4
      %s31 = int_to_ptr.vmem [resolvable:$true] %s30
      %36 = dma.hbm_to_vmem [thread:$0]  %s1, 512, %s31, [#allocation6], 128, 128, 8
    $region9: #{tpu_custom_call.1} parent=1 // pred_fallthru
      _
    // Predicated region
    $region10: #{tpu_custom_call.1} parent=1 // pred_check
      _
    $region11: #{tpu_custom_call.1} parent=1 // pred_check_branch
      %38 = sbr.rel (0) target = $region13
    $region12: #{tpu_custom_call.1} parent=1 // pred_region
      %39 = dma.done [#allocation3], 256
    $region13: #{tpu_custom_call.1} parent=1 // pred_fallthru
      _
    // Predicated region
    $region14: #{tpu_custom_call.1} parent=1 // pred_check
      _
    $region15: #{tpu_custom_call.1} parent=1 // pred_check_branch
      %41 = sbr.rel (0) target = $region17
    $region16: #{tpu_custom_call.1} parent=1 // pred_region
      %42 = dma.done [#allocation6], 512
    $region17: #{tpu_custom_call.1} parent=1 // pred_fallthru
      _
    %v43 = vld [vmem:[#allocation2] sm:$0xff]
    %v44 = vld [vmem:[#allocation2 + $0x8] sm:$0xff]
    %v45 = vld [vmem:[#allocation5] sm:$0xff]
    %v46 = vld [vmem:[#allocation5 + $0x8] sm:$0xff]
    %v47 = vld [vmem:[#allocation5 + $0x10] sm:$0xff]
    %v48 = vld [vmem:[#allocation5 + $0x18] sm:$0xff]
    %vm49 = vcmask 261120
    %v51 = vsel %vm49, %v43, 0
    %v54 = vsel %vm49, %v45, 0
    %v57 = vsel %vm49, %v46, 0
    %59 = vmatprep.subr.mxu0 0.0
    %60 = vmatpush1.xpose.msra.mxu0 %v54
    %61 = vmatprep.subr.mxu0 0.0
    %62 = vmatpush1.xpose.msra.mxu0 %v57
    %63 = vmatprep.subr.mxu0 0.0
    %64 = vmatpush1.xpose.msra.mxu0 0.0
    %65 = vmatprep.subr.mxu0 0.0
    %66 = vmatpush1.xpose.msra.mxu0 0.0
    %67 = vmatprep.subr.mxu0 0.0
    %68 = vmatpush1.xpose.msra.mxu0 0.0
    %69 = vmatprep.subr.mxu0 0.0
    %70 = vmatpush1.xpose.msra.mxu0 0.0
    %71 = vmatprep.subr.mxu0 0.0
    %72 = vmatpush1.xpose.msra.mxu0 0.0
    %73 = vmatprep.subr.mxu0 0.0
    %74 = vmatpush1.xpose.msra.mxu0 0.0
    %75 = vmatprep.subr.mxu0 0.0
    %76 = vmatpush1.xpose.msra.mxu0 0.0
    %77 = vmatprep.subr.mxu0 0.0
    %78 = vmatpush1.xpose.msra.mxu0 0.0
    %79 = vmatprep.subr.mxu0 0.0
    %80 = vmatpush1.xpose.msra.mxu0 0.0
    %81 = vmatprep.subr.mxu0 0.0
    %82 = vmatpush1.xpose.msra.mxu0 0.0
    %83 = vmatprep.subr.mxu0 0.0
    %84 = vmatpush1.xpose.msra.mxu0 0.0
    %85 = vmatprep.subr.mxu0 0.0
    %86 = vmatpush1.xpose.msra.mxu0 0.0
    %87 = vmatprep.subr.mxu0 0.0
    %88 = vmatpush1.xpose.msra.mxu0 0.0
    %89 = vmatprep.subr.mxu0 0.0
    %90 = vmatpush1.xpose.msra.mxu0 0.0
    %91 = vmatprep.subr.mxu0 0.0
    %92 = vmatpush1.xpose.msra.mxu0 0.0
    %93 = vmatprep.subr.mxu0 0.0
    %94 = vmatpush1.xpose.msra.mxu0 0.0
    %95 = vmatprep.subr.mxu0 0.0
    %96 = vmatpush1.xpose.msra.mxu0 0.0
    %97 = vmatprep.subr.mxu0 0.0
    %98 = vmatpush1.xpose.msra.mxu0 0.0
    %99 = vmatprep.subr.mxu0 0.0
    %100 = vmatpush1.xpose.msra.mxu0 0.0
    %101 = vmatprep.subr.mxu0 0.0
    %102 = vmatpush1.xpose.msra.mxu0 0.0
    %103 = vmatprep.subr.mxu0 0.0
    %104 = vmatpush1.xpose.msra.mxu0 0.0
    %105 = vmatprep.subr.mxu0 0.0
    %106 = vmatpush1.xpose.msra.mxu0 0.0
    %107 = vmatprep.subr.mxu0 0.0
    %108 = vmatpush1.xpose.msra.mxu0 0.0
    %109 = vmatprep.subr.mxu0 0.0
    %110 = vmatpush1.xpose.msra.mxu0 0.0
    %111 = vmatprep.subr.mxu0 0.0
    %112 = vmatpush1.xpose.msra.mxu0 0.0
    %113 = vmatprep.subr.mxu0 0.0
    %114 = vmatpush1.xpose.msra.mxu0 0.0
    %115 = vmatprep.subr.mxu0 0.0
    %116 = vmatpush1.xpose.msra.mxu0 0.0
    %117 = vmatprep.subr.mxu0 0.0
    %118 = vmatpush1.xpose.msra.mxu0 0.0
    %119 = vmatprep.subr.mxu0 0.0
    %120 = vmatpush1.xpose.msra.mxu0 0.0
    %121 = vmatprep.subr.mxu0 0.0
    %122 = vmatpush1.xpose.msra.mxu0 0.0
    %123 = vmatprep.mubr.f32.mxu0 0.0
    %124 = vmatmul.mubr.f32.gmra.mrb[0].mxu0 %v51
    %v125 = vpop.f32.mrb[0].mxu0
    %v126 = vadd.f32 0.0, %v125
    %v127 = vpop.f32.mrb[0].mxu0
    %128 = vdwg.mxu0
    %v130 = vsel %vm49, %v44, 0
    %v133 = vsel %vm49, %v47, 0
    %v136 = vsel %vm49, %v48, 0
    %138 = vmatprep.subr.mxu0 0.0
    %139 = vmatpush1.xpose.msra.mxu0 %v133
    %140 = vmatprep.subr.mxu0 0.0
    %141 = vmatpush1.xpose.msra.mxu0 %v136
    %142 = vmatprep.subr.mxu0 0.0
    %143 = vmatpush1.xpose.msra.mxu0 0.0
    %144 = vmatprep.subr.mxu0 0.0
    %145 = vmatpush1.xpose.msra.mxu0 0.0
    %146 = vmatprep.subr.mxu0 0.0
    %147 = vmatpush1.xpose.msra.mxu0 0.0
    %148 = vmatprep.subr.mxu0 0.0
    %149 = vmatpush1.xpose.msra.mxu0 0.0
    %150 = vmatprep.subr.mxu0 0.0
    %151 = vmatpush1.xpose.msra.mxu0 0.0
    %152 = vmatprep.subr.mxu0 0.0
    %153 = vmatpush1.xpose.msra.mxu0 0.0
    %154 = vmatprep.subr.mxu0 0.0
    %155 = vmatpush1.xpose.msra.mxu0 0.0
    %156 = vmatprep.subr.mxu0 0.0
    %157 = vmatpush1.xpose.msra.mxu0 0.0
    %158 = vmatprep.subr.mxu0 0.0
    %159 = vmatpush1.xpose.msra.mxu0 0.0
    %160 = vmatprep.subr.mxu0 0.0
    %161 = vmatpush1.xpose.msra.mxu0 0.0
    %162 = vmatprep.subr.mxu0 0.0
    %163 = vmatpush1.xpose.msra.mxu0 0.0
    %164 = vmatprep.subr.mxu0 0.0
    %165 = vmatpush1.xpose.msra.mxu0 0.0
    %166 = vmatprep.subr.mxu0 0.0
    %167 = vmatpush1.xpose.msra.mxu0 0.0
    %168 = vmatprep.subr.mxu0 0.0
    %169 = vmatpush1.xpose.msra.mxu0 0.0
    %170 = vmatprep.subr.mxu0 0.0
    %171 = vmatpush1.xpose.msra.mxu0 0.0
    %172 = vmatprep.subr.mxu0 0.0
    %173 = vmatpush1.xpose.msra.mxu0 0.0
    %174 = vmatprep.subr.mxu0 0.0
    %175 = vmatpush1.xpose.msra.mxu0 0.0
    %176 = vmatprep.subr.mxu0 0.0
    %177 = vmatpush1.xpose.msra.mxu0 0.0
    %178 = vmatprep.subr.mxu0 0.0
    %179 = vmatpush1.xpose.msra.mxu0 0.0
    %180 = vmatprep.subr.mxu0 0.0
    %181 = vmatpush1.xpose.msra.mxu0 0.0
    %182 = vmatprep.subr.mxu0 0.0
    %183 = vmatpush1.xpose.msra.mxu0 0.0
    %184 = vmatprep.subr.mxu0 0.0
    %185 = vmatpush1.xpose.msra.mxu0 0.0
    %186 = vmatprep.subr.mxu0 0.0
    %187 = vmatpush1.xpose.msra.mxu0 0.0
    %188 = vmatprep.subr.mxu0 0.0
    %189 = vmatpush1.xpose.msra.mxu0 0.0
    %190 = vmatprep.subr.mxu0 0.0
    %191 = vmatpush1.xpose.msra.mxu0 0.0
    %192 = vmatprep.subr.mxu0 0.0
    %193 = vmatpush1.xpose.msra.mxu0 0.0
    %194 = vmatprep.subr.mxu0 0.0
    %195 = vmatpush1.xpose.msra.mxu0 0.0
    %196 = vmatprep.subr.mxu0 0.0
    %197 = vmatpush1.xpose.msra.mxu0 0.0
    %198 = vmatprep.subr.mxu0 0.0
    %199 = vmatpush1.xpose.msra.mxu0 0.0
    %200 = vmatprep.subr.mxu0 0.0
    %201 = vmatpush1.xpose.msra.mxu0 0.0
    %202 = vmatprep.mubr.f32.mxu0 0.0
    %203 = vmatmul.mubr.f32.gmra.mrb[0].mxu0 %v130
    %v204 = vpop.f32.mrb[0].mxu0
    %v205 = vadd.f32 0.0, %v204
    %v206 = vpop.f32.mrb[0].mxu0
    %207 = vdwg.mxu0
    %vm208 = vcmask 130048
    %v209 = vsel %vm208, %v126, -inf
    %210 = vmax.xlane.f32.xlu0 %v209
    %v211 = vpop.xlane.xlu0 %210
    %v212 = vsel %vm208, %v205, -inf
    %213 = vmax.xlane.f32.xlu0 %v212
    %v214 = vpop.xlane.xlu0 %213
    %v215 = vsub.f32 %v126, %v211
    %v216 = vsub.f32 %v205, %v214
    %v217 = vmul.f32 %v215, 1.442695
    %v218 = vpow.pop %v217
    %v219 = vmul.f32 %v216, 1.442695
    %v220 = vpow.pop %v219
    %v221 = vsel %vm208, %v218, 0.0
    %222 = vadd.xlane.f32.xlu0 %v221
    %v223 = vpop.xlane.xlu0 %222
    %v224 = vsel %vm208, %v220, 0.0
    %225 = vadd.xlane.f32.xlu0 %v224
    %v226 = vpop.xlane.xlu0 %225
    %v227 = vrcp.pop %v223
    %v228 = vrcp.pop %v226
    %v229 = vmul.f32 %v218, %v227
    %v230 = vmul.f32 %v220, %v228
    %v232 = vsel %vm208, %v229, 0
    %234 = vmatprep.subr.mxu0 0.0
    %235 = vmatpush1.msra.mxu0 %v45
    %236 = vmatprep.subr.mxu0 0.0
    %237 = vmatpush1.msra.mxu0 %v46
    %238 = vmatprep.subr.mxu0 0.0
    %239 = vmatpush1.msra.mxu0 0.0
    %240 = vmatprep.subr.mxu0 0.0
    %241 = vmatpush1.msra.mxu0 0.0
    %242 = vmatprep.subr.mxu0 0.0
    %243 = vmatpush1.msra.mxu0 0.0
    %244 = vmatprep.subr.mxu0 0.0
    %245 = vmatpush1.msra.mxu0 0.0
    %246 = vmatprep.subr.mxu0 0.0
    %247 = vmatpush1.msra.mxu0 0.0
    %248 = vmatprep.subr.mxu0 0.0
    %249 = vmatpush1.msra.mxu0 0.0
    %250 = vmatprep.subr.mxu0 0.0
    %251 = vmatpush1.msra.mxu0 0.0
    %252 = vmatprep.subr.mxu0 0.0
    %253 = vmatpush1.msra.mxu0 0.0
    %254 = vmatprep.subr.mxu0 0.0
    %255 = vmatpush1.msra.mxu0 0.0
    %256 = vmatprep.subr.mxu0 0.0
    %257 = vmatpush1.msra.mxu0 0.0
    %258 = vmatprep.subr.mxu0 0.0
    %259 = vmatpush1.msra.mxu0 0.0
    %260 = vmatprep.subr.mxu0 0.0
    %261 = vmatpush1.msra.mxu0 0.0
    %262 = vmatprep.subr.mxu0 0.0
    %263 = vmatpush1.msra.mxu0 0.0
    %264 = vmatprep.subr.mxu0 0.0
    %265 = vmatpush1.msra.mxu0 0.0
    %266 = vmatprep.subr.mxu0 0.0
    %267 = vmatpush1.msra.mxu0 0.0
    %268 = vmatprep.subr.mxu0 0.0
    %269 = vmatpush1.msra.mxu0 0.0
    %270 = vmatprep.subr.mxu0 0.0
    %271 = vmatpush1.msra.mxu0 0.0
    %272 = vmatprep.subr.mxu0 0.0
    %273 = vmatpush1.msra.mxu0 0.0
    %274 = vmatprep.subr.mxu0 0.0
    %275 = vmatpush1.msra.mxu0 0.0
    %276 = vmatprep.subr.mxu0 0.0
    %277 = vmatpush1.msra.mxu0 0.0
    %278 = vmatprep.subr.mxu0 0.0
    %279 = vmatpush1.msra.mxu0 0.0
    %280 = vmatprep.subr.mxu0 0.0
    %281 = vmatpush1.msra.mxu0 0.0
    %282 = vmatprep.subr.mxu0 0.0
    %283 = vmatpush1.msra.mxu0 0.0
    %284 = vmatprep.subr.mxu0 0.0
    %285 = vmatpush1.msra.mxu0 0.0
    %286 = vmatprep.subr.mxu0 0.0
    %287 = vmatpush1.msra.mxu0 0.0
    %288 = vmatprep.subr.mxu0 0.0
    %289 = vmatpush1.msra.mxu0 0.0
    %290 = vmatprep.subr.mxu0 0.0
    %291 = vmatpush1.msra.mxu0 0.0
    %292 = vmatprep.subr.mxu0 0.0
    %293 = vmatpush1.msra.mxu0 0.0
    %294 = vmatprep.subr.mxu0 0.0
    %295 = vmatpush1.msra.mxu0 0.0
    %296 = vmatprep.subr.mxu0 0.0
    %297 = vmatpush1.msra.mxu0 0.0
    %298 = vmatprep.mubr.f32.mxu0 0.0
    %299 = vmatmul.mubr.f32.gmra.mrb[0].mxu0 %v232
    %v300 = vpop.f32.mrb[0].mxu0
    %v301 = vadd.f32 0.0, %v300
    %v302 = vpop.f32.mrb[0].mxu0
    %303 = vdwg.mxu0
    %v305 = vsel %vm208, %v230, 0
    %307 = vmatprep.subr.mxu0 0.0
    %308 = vmatpush1.msra.mxu0 %v47
    %309 = vmatprep.subr.mxu0 0.0
    %310 = vmatpush1.msra.mxu0 %v48
    %311 = vmatprep.subr.mxu0 0.0
    %312 = vmatpush1.msra.mxu0 0.0
    %313 = vmatprep.subr.mxu0 0.0
    %314 = vmatpush1.msra.mxu0 0.0
    %315 = vmatprep.subr.mxu0 0.0
    %316 = vmatpush1.msra.mxu0 0.0
    %317 = vmatprep.subr.mxu0 0.0
    %318 = vmatpush1.msra.mxu0 0.0
    %319 = vmatprep.subr.mxu0 0.0
    %320 = vmatpush1.msra.mxu0 0.0
    %321 = vmatprep.subr.mxu0 0.0
    %322 = vmatpush1.msra.mxu0 0.0
    %323 = vmatprep.subr.mxu0 0.0
    %324 = vmatpush1.msra.mxu0 0.0
    %325 = vmatprep.subr.mxu0 0.0
    %326 = vmatpush1.msra.mxu0 0.0
    %327 = vmatprep.subr.mxu0 0.0
    %328 = vmatpush1.msra.mxu0 0.0
    %329 = vmatprep.subr.mxu0 0.0
    %330 = vmatpush1.msra.mxu0 0.0
    %331 = vmatprep.subr.mxu0 0.0
    %332 = vmatpush1.msra.mxu0 0.0
    %333 = vmatprep.subr.mxu0 0.0
    %334 = vmatpush1.msra.mxu0 0.0
    %335 = vmatprep.subr.mxu0 0.0
    %336 = vmatpush1.msra.mxu0 0.0
    %337 = vmatprep.subr.mxu0 0.0
    %338 = vmatpush1.msra.mxu0 0.0
    %339 = vmatprep.subr.mxu0 0.0
    %340 = vmatpush1.msra.mxu0 0.0
    %341 = vmatprep.subr.mxu0 0.0
    %342 = vmatpush1.msra.mxu0 0.0
    %343 = vmatprep.subr.mxu0 0.0
    %344 = vmatpush1.msra.mxu0 0.0
    %345 = vmatprep.subr.mxu0 0.0
    %346 = vmatpush1.msra.mxu0 0.0
    %347 = vmatprep.subr.mxu0 0.0
    %348 = vmatpush1.msra.mxu0 0.0
    %349 = vmatprep.subr.mxu0 0.0
    %350 = vmatpush1.msra.mxu0 0.0
    %351 = vmatprep.subr.mxu0 0.0
    %352 = vmatpush1.msra.mxu0 0.0
    %353 = vmatprep.subr.mxu0 0.0
    %354 = vmatpush1.msra.mxu0 0.0
    %355 = vmatprep.subr.mxu0 0.0
    %356 = vmatpush1.msra.mxu0 0.0
    %357 = vmatprep.subr.mxu0 0.0
    %358 = vmatpush1.msra.mxu0 0.0
    %359 = vmatprep.subr.mxu0 0.0
    %360 = vmatpush1.msra.mxu0 0.0
    %361 = vmatprep.subr.mxu0 0.0
    %362 = vmatpush1.msra.mxu0 0.0
    %363 = vmatprep.subr.mxu0 0.0
    %364 = vmatpush1.msra.mxu0 0.0
    %365 = vmatprep.subr.mxu0 0.0
    %366 = vmatpush1.msra.mxu0 0.0
    %367 = vmatprep.subr.mxu0 0.0
    %368 = vmatpush1.msra.mxu0 0.0
    %369 = vmatprep.subr.mxu0 0.0
    %370 = vmatpush1.msra.mxu0 0.0
    %371 = vmatprep.mubr.f32.mxu0 0.0
    %372 = vmatmul.mubr.f32.gmra.mrb[0].mxu0 %v305
    %v373 = vpop.f32.mrb[0].mxu0
    %v374 = vadd.f32 0.0, %v373
    %v375 = vpop.f32.mrb[0].mxu0
    %376 = vdwg.mxu0
    %377 = vst.msk [vmem:[#allocation7] sm:$0xff] %vm49, %v301
    %378 = vst.msk [vmem:[#allocation7 + $0x8] sm:$0xff] %vm49, %v374
    %379 = vst.msk [vmem:[#allocation8] sm:$0xff] %vm208, %v229
    %380 = vst.msk [vmem:[#allocation8 + $0x8] sm:$0xff] %vm208, %v230
    // Predicated region
    $region18: #{tpu_custom_call.1} parent=1 // pred_check
      _
    $region19: #{tpu_custom_call.1} parent=1 // pred_check_branch
      %382 = sbr.rel (0) target = $region21
    $region20: #{tpu_custom_call.1} parent=1 // pred_region
      %s384 = ssub.s32 256, 256
      %385 = vsyncadd [#allocation4], %s384
      %s386 = sshll.u32 [#allocation7], 4
      %s387 = int_to_ptr.vmem [resolvable:$true] %s386
      %392 = dma.vmem_to_hbm [thread:$0]  %s387, 256, %s2, [#allocation4], 128, 128, 8
    $region21: #{tpu_custom_call.1} parent=1 // pred_fallthru
      _
    // Predicated region
    $region22: #{tpu_custom_call.1} parent=1 // pred_check
      _
    $region23: #{tpu_custom_call.1} parent=1 // pred_check_branch
      %394 = sbr.rel (0) target = $region25
    $region24: #{tpu_custom_call.1} parent=1 // pred_region
      %s396 = ssub.s32 256, 256
      %397 = vsyncadd [#allocation9], %s396
      %s398 = sshll.u32 [#allocation8], 4
      %s399 = int_to_ptr.vmem [resolvable:$true] %s398
      %404 = dma.vmem_to_hbm [thread:$0]  %s399, 256, %s3, [#allocation9], 128, 128, 8
    $region25: #{tpu_custom_call.1} parent=1 // pred_fallthru
      _
    // Predicated region
    $region26: #{tpu_custom_call.1} parent=1 // pred_check
      _
    $region27: #{tpu_custom_call.1} parent=1 // pred_check_branch
      %406 = sbr.rel (0) target = $region29
    $region28: #{tpu_custom_call.1} parent=1 // pred_region
      %407 = dma.done [#allocation4], 256
    $region29: #{tpu_custom_call.1} parent=1 // pred_fallthru
      _
    // Predicated region
    $region30: #{tpu_custom_call.1} parent=1 // pred_check
      _
    $region31: #{tpu_custom_call.1} parent=1 // pred_check_branch
      %409 = sbr.rel (0) target = $region33
    $region32: #{tpu_custom_call.1} parent=1 // pred_region
      %410 = dma.done [#allocation9], 256
    $region33: #{tpu_custom_call.1} parent=1 // pred_fallthru
      _
    %411 = vsyncpa [#allocation3], 1
    %412 = vsyncpa [#allocation6], 1
    %413 = vsyncpa [#allocation4], 1
    %414 = vsyncpa [#allocation9], 1

</llo_original>
